<compile_context>
chip_gen: v6e
topology: v6e:2x2x1
jax: 0.10.0
libtpu: 0.0.40
codegen_flags: <defaults>
</compile_context>

<pallas_src>
import jax
import jax.numpy as jnp
from jax.experimental import pallas as pl
from jax.experimental.pallas import tpu as pltpu


def _lr_predict_kernel(xt_ref, w_ref, b_ref, o_ref):
    # xt_ref: (F, TILE_N)    native dtype, feature-major (lane-dense)
    # w_ref : (C, F)         native dtype, VMEM-resident
    # b_ref : (C, 1)         f32,          VMEM-resident
    # o_ref : (1, 1, TILE_N) int32 lane-dense prediction row for this tile
    #
    # logits[c, n] = sum_f W[c, f] * xT[f, n] + b[c]
    # Canonical [M,K] x [K,N] contraction -> straight into the MXU, f32 acc.
    logits = jax.lax.dot_general(
        w_ref[...],
        xt_ref[...],
        dimension_numbers=(((1,), (0,)), ((), ())),
        preferred_element_type=jnp.float32,
    ) + b_ref[...]                                            # (C, TILE_N) f32

    c, tn = logits.shape
    # First-occurrence argmax over the class (sublane) axis, matching
    # np.argmax / sklearn tie-breaking: smallest class index among the maxima.
    max_val = jnp.max(logits, axis=0, keepdims=True)          # (1, TILE_N)
    cls_idx = jax.lax.broadcasted_iota(jnp.int32, (c, tn), dimension=0)
    pred = jnp.min(
        jnp.where(logits == max_val, cls_idx, jnp.int32(c)),
        axis=0,
        keepdims=True,
    )                                                         # (1, TILE_N)
    o_ref[...] = pred[None].astype(jnp.int32)                 # (1, 1, TILE_N)


def lr_predict(x, w, b, *, target_block_bytes=2 * 1024 * 1024,
               stream_dtype=None):
    """Multinomial logistic-regression predict: argmax(x @ W.T + b, axis=-1).

    x: [N, F] samples, w: [C, F] coef_, b: [C] intercept_.
    Streams x feature-major in tiles of the batch dimension; W and b stay
    VMEM-resident.  `stream_dtype` (e.g. jnp.bfloat16) optionally narrows the
    streamed x/W bytes while keeping f32 MXU accumulation.
    """
    n, f = x.shape
    c, f_w = w.shape
    assert f == f_w, "feature dims of x and W must match"

    if stream_dtype is not None:
        x = x.astype(stream_dtype)
        w = w.astype(stream_dtype)
    itemsize = jnp.dtype(x.dtype).itemsize

    # Lane-aligned padded batch.
    n_pad = ((n + 127) // 128) * 128

    # Auto-size tile_n so each streamed (F, tile_n) x block is ~2 MiB
    # (double buffered by the BlockSpec pipeline), rounded to a multiple of
    # 128 (lane-dense loads AND unmasked int32 prediction stores).
    tile_n = target_block_bytes // max(1, f * itemsize)
    tile_n = max(128, (tile_n // 128) * 128)
    tile_n = min(tile_n, n_pad)

    # Megacore (v7x): when the padded batch allows it, cap the tile at half
    # the batch so the "parallel" grid has >= 2 tiles and both TCs get work.
    if n_pad >= 256:
        half = ((n_pad // 2 + 127) // 128) * 128
        tile_n = min(tile_n, half)

    num_tiles = pl.cdiv(n_pad, tile_n)
    n_pad = num_tiles * tile_n

    # Feature-major, lane-dense x:  xT is (F, N_pad).  (Callers that already
    # hold features feature-major can pass them through without this transpose.)
    xt = jnp.pad(x.T, ((0, 0), (0, n_pad - n)))

    b2d = b.reshape(c, 1).astype(jnp.float32)

    out = pl.pallas_call(
        _lr_predict_kernel,
        out_shape=jax.ShapeDtypeStruct((num_tiles, 1, tile_n), jnp.int32),
        grid_spec=pl.GridSpec(
            grid=(num_tiles,),
            in_specs=[
                pl.BlockSpec((f, tile_n), lambda i: (0, i)),   # xT: streamed tiles
                pl.BlockSpec((c, f), lambda i: (0, 0)),        # W : VMEM-resident
                pl.BlockSpec((c, 1), lambda i: (0, 0)),        # b : VMEM-resident
            ],
            out_specs=pl.BlockSpec((1, 1, tile_n), lambda i: (i, 0, 0)),
        ),
        compiler_params=pltpu.CompilerParams(
            # Independent batch tiles -> parallel (megacore sharding on v7x).
            dimension_semantics=("parallel",),
            # 48 MiB: safe on v7x's 64 MiB physical VMEM, generous for v5e/v6e.
            vmem_limit_bytes=48 * 1024 * 1024,
        ),
    )(xt, w, b2d)

    return out.reshape(n_pad)[:n]


if __name__ == "__main__":
    # Small synthetic problem: N samples, F extracted features, C classes.
    N, F, C = 16, 32, 8

    key = jax.random.PRNGKey(0)
    kx, kw, kb = jax.random.split(key, 3)
    x = jax.random.normal(kx, (N, F), dtype=jnp.float32)
    # Deterministic synthetic LR parameters (coef_ shape (C, F), intercept_ (C,)).
    w = jax.random.normal(kw, (C, F), dtype=jnp.float32) * 0.1
    b = jax.random.normal(kb, (C,), dtype=jnp.float32) * 0.1

    pred = lr_predict(x, w, b)
    jax.block_until_ready(pred)

    # Reference check in plain JAX.
    ref = jnp.argmax(x @ w.T + b[None, :], axis=-1).astype(jnp.int32)
    assert pred.shape == (N,)
    assert bool(jnp.all(pred == ref))
    print("KERNEL_OK")
</pallas_src>

<mosaic_0001>
module attributes {stable_mosaic.version = 11 : i64} {
  func.func @_lr_predict_kernel(%arg0: i32, %arg1: memref<32x128xf32, #tpu.memory_space<vmem>>, %arg2: memref<8x32xf32, #tpu.memory_space<vmem>>, %arg3: memref<8x1xf32, #tpu.memory_space<vmem>>, %arg4: memref<1x1x128xi32, #tpu.memory_space<vmem>>) attributes {dimension_semantics = [#tpu.dimension_semantics<parallel>], iteration_bounds = array<i64: 1>, scalar_prefetch = 0 : i64, scratch_operands = 0 : i64, tpu.core_type = #tpu.core_type<tc>, window_params = [{transform_indices = @transform_0, window_bounds = array<i64: 32, 128>}, {pipeline_mode = #tpu.pipeline_mode<synchronous>, transform_indices = @transform_1, window_bounds = array<i64: 8, 32>}, {pipeline_mode = #tpu.pipeline_mode<synchronous>, transform_indices = @transform_2, window_bounds = array<i64: 8, 1>}, {transform_indices = @transform_3, window_bounds = array<i64: 1, 1, 128>}]} {
    %c0 = arith.constant 0 : index
    %c0_0 = arith.constant 0 : index
    %0 = vector.load %arg2[%c0, %c0_0] : memref<8x32xf32, #tpu.memory_space<vmem>>, vector<8x32xf32>
    %c0_1 = arith.constant 0 : index
    %c0_2 = arith.constant 0 : index
    %1 = vector.load %arg1[%c0_1, %c0_2] : memref<32x128xf32, #tpu.memory_space<vmem>>, vector<32x128xf32>
    %cst = arith.constant dense<0.000000e+00> : vector<8x128xf32>
    %2 = tpu.matmul %0, %1, %cst {dimension_numbers = #tpu.dot_dimension_numbers<[1], [0], [0], [1], [0, 0, 1, 1], [], []>} : vector<8x32xf32>, vector<32x128xf32>, vector<8x128xf32> -> vector<8x128xf32>
    %c0_3 = arith.constant 0 : index
    %c0_4 = arith.constant 0 : index
    %3 = vector.load %arg3[%c0_3, %c0_4] : memref<8x1xf32, #tpu.memory_space<vmem>>, vector<8x1xf32>
    %4 = vector.broadcast %3 : vector<8x1xf32> to vector<8x128xf32>
    %5 = arith.addf %2, %4 : vector<8x128xf32>
    %cst_5 = arith.constant dense<0xFF800000> : vector<128xf32>
    %6 = vector.multi_reduction <maximumf>, %5, %cst_5 [0] : vector<8x128xf32> to vector<128xf32>
    %7 = vector.shape_cast %6 : vector<128xf32> to vector<1x128xf32>
    %8 = tpu.iota {dimensions = array<i32: 0>} : vector<8x128xi32>
    %9 = vector.broadcast %7 : vector<1x128xf32> to vector<8x128xf32>
    %10 = arith.cmpf oeq, %5, %9 : vector<8x128xf32>
    %c8_i32 = arith.constant 8 : i32
    %11 = vector.broadcast %c8_i32 : i32 to vector<8x128xi32>
    %12 = arith.select %10, %8, %11 : vector<8x128xi1>, vector<8x128xi32>
    %cst_6 = arith.constant dense<2147483647> : vector<128xi32>
    %13 = vector.multi_reduction <minsi>, %12, %cst_6 [0] : vector<8x128xi32> to vector<128xi32>
    %14 = vector.shape_cast %13 : vector<128xi32> to vector<1x128xi32>
    %15 = vector.shape_cast %14 : vector<1x128xi32> to vector<1x1x128xi32>
    %c0_7 = arith.constant 0 : index
    %c0_8 = arith.constant 0 : index
    %c0_9 = arith.constant 0 : index
    %16 = vector.load %arg4[%c0_7, %c0_8, %c0_9] : memref<1x1x128xi32, #tpu.memory_space<vmem>>, vector<1x1x128xi32>
    tpu.vector_store %arg4[%c0_7, %c0_8, %c0_9], %15 {strides = array<i32>} : memref<1x1x128xi32, #tpu.memory_space<vmem>>, vector<1x1x128xi32>,
    return
  }
  func.func @transform_0(%arg0: i32) -> (i32, i32) {
    %c0_i32 = arith.constant 0 : i32
    %c0_i32_0 = arith.constant 0 : i32
    return %c0_i32, %arg0 : i32, i32
  }
  func.func @transform_1(%arg0: i32) -> (i32, i32) {
    %c0_i32 = arith.constant 0 : i32
    %c0_i32_0 = arith.constant 0 : i32
    %c0_i32_1 = arith.constant 0 : i32
    return %c0_i32, %c0_i32_0 : i32, i32
  }
  func.func @transform_2(%arg0: i32) -> (i32, i32) {
    %c0_i32 = arith.constant 0 : i32
    %c0_i32_0 = arith.constant 0 : i32
    %c0_i32_1 = arith.constant 0 : i32
    return %c0_i32, %c0_i32_0 : i32, i32
  }
  func.func @transform_3(%arg0: i32) -> (i32, i32, i32) {
    %c0_i32 = arith.constant 0 : i32
    %c0_i32_0 = arith.constant 0 : i32
    %c0_i32_1 = arith.constant 0 : i32
    return %arg0, %c0_i32, %c0_i32_0 : i32, i32, i32
  }
}

</mosaic_0001>

<llo_original>
// kernel: tpu_custom_call.1
$region0: #{tpu_custom_call.1}
  #allocation0 [shape = 'u32[]', space=smem, size = 0x4, offset = 0x4, fixed_abs, tag = 'smem constant byte address 0x4 - core index']
  #allocation1 [shape = 'u32[144,128]{1,0:T(1,128)}', space=vmem, size = 0x12000, scoped, tag = 'internal scratch']
  %s0 = inlined_call_operand.hbm [shape: f32[32,128], index: 0, kind: input, shape index: {}]
  %s1 = inlined_call_operand.vmem [shape: f32[8,32], index: 1, kind: input, shape index: {}]
  %s2 = inlined_call_operand.vmem [shape: f32[8,1], index: 2, kind: input, shape index: {}]
  %s3 = inlined_call_operand.hbm [shape: s32[1,1,128], index: 3, kind: output, shape index: {}]
  %s4 = sld [smem:[#allocation0]]
  $region26: #{tpu_custom_call.1} parent=0
    _
  %s6 = ssub.s32 1, %s4
  %s7 = scalar_select 0, %s6, %s4
  $region1: #{tpu_custom_call.1} parent=0
    #allocation2 [shape = 'u8[16384]{0}', space=vmem, size = 0x4000, scoped, tag = 'input window, operand 0, single buffered']
    #allocation3 [shape = 's32[1]{0}', space=sflag, size = 0x4, scoped, tag = 'scoped memory for tpu_custom_call.1']
    #allocation4 [shape = 's32[1]{0}', space=sflag, size = 0x4, scoped, tag = 'scoped memory for tpu_custom_call.1']
    #allocation5 [shape = 'u8[512]{0}', space=vmem, size = 0x400, scoped, tag = 'output window, operand 0, single buffered']
    %8 = vsyncpa [#allocation3], 0
    %9 = vsyncpa [#allocation4], 0
    // Predicated region
    $region2: #{tpu_custom_call.1} parent=1 // pred_check
      _
    $region3: #{tpu_custom_call.1} parent=1 // pred_check_branch
      %11 = sbr.rel (0) target = $region5
    $region4: #{tpu_custom_call.1} parent=1 // pred_region
      %s13 = ssub.s32 512, 512
      %14 = vsyncadd [#allocation3], %s13
      %s15 = sshll.u32 [#allocation2], 4
      %s16 = int_to_ptr.vmem [resolvable:$true] %s15
      %21 = dma.hbm_to_vmem [thread:$0]  %s0, 512, %s16, [#allocation3], 128, 128, 8
    $region5: #{tpu_custom_call.1} parent=1 // pred_fallthru
      _
    // Predicated region
    $region6: #{tpu_custom_call.1} parent=1 // pred_check
      _
    $region7: #{tpu_custom_call.1} parent=1 // pred_check_branch
      %23 = sbr.rel (0) target = $region9
    $region8: #{tpu_custom_call.1} parent=1 // pred_region
      _
    $region9: #{tpu_custom_call.1} parent=1 // pred_fallthru
      _
    // Predicated region
    $region10: #{tpu_custom_call.1} parent=1 // pred_check
      _
    $region11: #{tpu_custom_call.1} parent=1 // pred_check_branch
      %25 = sbr.rel (0) target = $region13
    $region12: #{tpu_custom_call.1} parent=1 // pred_region
      _
    $region13: #{tpu_custom_call.1} parent=1 // pred_fallthru
      _
    // Predicated region
    $region14: #{tpu_custom_call.1} parent=1 // pred_check
      _
    $region15: #{tpu_custom_call.1} parent=1 // pred_check_branch
      %27 = sbr.rel (0) target = $region17
    $region16: #{tpu_custom_call.1} parent=1 // pred_region
      %28 = dma.done [#allocation3], 512
    $region17: #{tpu_custom_call.1} parent=1 // pred_fallthru
      _
    %v29 = vld [vmem:[%s1] sm:$0xff]
    %v30 = vld [vmem:[#allocation2] sm:$0xff]
    %v31 = vld [vmem:[#allocation2 + $0x8] sm:$0xff]
    %v32 = vld [vmem:[#allocation2 + $0x10] sm:$0xff]
    %v33 = vld [vmem:[#allocation2 + $0x18] sm:$0xff]
    %v34 = vld [vmem:[%s2] sm:$0xff]
    %36 = vset.pattern.permute.xlu0 0
    %37 = vperm.xlu0 %36, %v34
    %v38 = vpop.permute.xlu0 %37
    %vm40 = vcmask 261120
    %v42 = vsel %vm40, %v29, 0
    %44 = vmatprep.subr.mxu0 0.0
    %45 = vmatpush1.msra.mxu0 0.0
    %46 = vmatprep.subr.mxu0 0.0
    %47 = vmatpush1.msra.mxu0 0.0
    %48 = vmatprep.subr.mxu0 0.0
    %49 = vmatpush1.msra.mxu0 0.0
    %50 = vmatprep.subr.mxu0 0.0
    %51 = vmatpush1.msra.mxu0 0.0
    %52 = vmatprep.subr.mxu0 0.0
    %53 = vmatpush1.msra.mxu0 0.0
    %54 = vmatprep.subr.mxu0 0.0
    %55 = vmatpush1.msra.mxu0 0.0
    %56 = vmatprep.subr.mxu0 0.0
    %57 = vmatpush1.msra.mxu0 0.0
    %58 = vmatprep.subr.mxu0 0.0
    %59 = vmatpush1.msra.mxu0 0.0
    %60 = vmatprep.subr.mxu0 0.0
    %61 = vmatpush1.msra.mxu0 0.0
    %62 = vmatprep.subr.mxu0 0.0
    %63 = vmatpush1.msra.mxu0 0.0
    %64 = vmatprep.subr.mxu0 0.0
    %65 = vmatpush1.msra.mxu0 0.0
    %66 = vmatprep.subr.mxu0 0.0
    %67 = vmatpush1.msra.mxu0 0.0
    %68 = vmatprep.subr.mxu0 0.0
    %69 = vmatpush1.msra.mxu0 %v33
    %70 = vmatprep.subr.mxu0 0.0
    %71 = vmatpush1.msra.mxu0 %v32
    %72 = vmatprep.subr.mxu0 0.0
    %73 = vmatpush1.msra.mxu0 %v31
    %74 = vmatprep.subr.mxu0 0.0
    %75 = vmatpush1.msra.mxu0 %v30
    %76 = vmatprep.subr.mxu0 0.0
    %77 = vmatpush2.msra.mxu0 0.0
    %78 = vmatprep.subr.mxu0 0.0
    %79 = vmatpush2.msra.mxu0 0.0
    %80 = vmatprep.subr.mxu0 0.0
    %81 = vmatpush2.msra.mxu0 0.0
    %82 = vmatprep.subr.mxu0 0.0
    %83 = vmatpush2.msra.mxu0 0.0
    %84 = vmatprep.subr.mxu0 0.0
    %85 = vmatpush2.msra.mxu0 0.0
    %86 = vmatprep.subr.mxu0 0.0
    %87 = vmatpush2.msra.mxu0 0.0
    %88 = vmatprep.subr.mxu0 0.0
    %89 = vmatpush2.msra.mxu0 0.0
    %90 = vmatprep.subr.mxu0 0.0
    %91 = vmatpush2.msra.mxu0 0.0
    %92 = vmatprep.subr.mxu0 0.0
    %93 = vmatpush2.msra.mxu0 0.0
    %94 = vmatprep.subr.mxu0 0.0
    %95 = vmatpush2.msra.mxu0 0.0
    %96 = vmatprep.subr.mxu0 0.0
    %97 = vmatpush2.msra.mxu0 0.0
    %98 = vmatprep.subr.mxu0 0.0
    %99 = vmatpush2.msra.mxu0 0.0
    %100 = vmatprep.subr.mxu0 0.0
    %101 = vmatpush2.msra.mxu0 0.0
    %102 = vmatprep.subr.mxu0 0.0
    %103 = vmatpush2.msra.mxu0 0.0
    %104 = vmatprep.subr.mxu0 0.0
    %105 = vmatpush2.msra.mxu0 0.0
    %106 = vmatprep.subr.mxu0 0.0
    %107 = vmatpush2.msra.mxu0 0.0
    %108 = vmatprep.mubr.f32.mxu0 0.0
    %109 = vmatmul.mubr.f32.gmra.mxu0 %v42
    %v110 = vpop.f32.mrf.mxu0
    %v111 = vadd.f32 %v38, %v110
    %v112 = vpop.f32.mrf.mxu0
    %113 = vdwg.mxu0
    %v114 = vrot.slane %v111, 4
    %v115 = vmax.f32 %v111, %v114
    %v116 = vrot.slane %v115, 2
    %v117 = vmax.f32 %v115, %v116
    %v118 = vrot.slane %v117, 1
    %v119 = vmax.f32 %v117, %v118
    %v120 = vlaneseq
    %v121 = vshrl.u32 %v120, 7
    %vm122 = vcmp.eq.f32.partialorder %v111, %v119
    %v123 = vsel %vm122, %v121, 8
    %v124 = vrot.slane %v123, 4
    %vm125 = vcmp.lt.s32.totalorder %v123, %v124
    %v126 = vsel %vm125, %v123, %v124
    %v127 = vrot.slane %v126, 2
    %vm128 = vcmp.lt.s32.totalorder %v126, %v127
    %v129 = vsel %vm128, %v126, %v127
    %v130 = vrot.slane %v129, 1
    %vm131 = vcmp.lt.s32.totalorder %v129, %v130
    %v132 = vsel %vm131, %v129, %v130
    %133 = vst [vmem:[#allocation5] sm:$0x1] %v132
    // Predicated region
    $region18: #{tpu_custom_call.1} parent=1 // pred_check
      _
    $region19: #{tpu_custom_call.1} parent=1 // pred_check_branch
      %135 = sbr.rel (0) target = $region21
    $region20: #{tpu_custom_call.1} parent=1 // pred_region
      %s137 = ssub.s32 16, 16
      %138 = vsyncadd [#allocation4], %s137
      %s140 = sshll.u32 [#allocation5], 4
      %s141 = int_to_ptr.vmem [resolvable:$true] %s140
      %143 = dma.vmem_to_hbm [thread:$0]  %s141, 16, %s3, [#allocation4]
    $region21: #{tpu_custom_call.1} parent=1 // pred_fallthru
      _
    // Predicated region
    $region22: #{tpu_custom_call.1} parent=1 // pred_check
      _
    $region23: #{tpu_custom_call.1} parent=1 // pred_check_branch
      %145 = sbr.rel (0) target = $region25
    $region24: #{tpu_custom_call.1} parent=1 // pred_region
      %146 = dma.done [#allocation4], 16
    $region25: #{tpu_custom_call.1} parent=1 // pred_fallthru
      _
    %147 = vsyncpa [#allocation3], 1
    %148 = vsyncpa [#allocation4], 1

</llo_original>
